<compile_context>
chip_gen: v5e
topology: v5e:2x2
jax: 0.10.0
libtpu: 0.0.40
codegen_flags: <defaults>
</compile_context>

<pallas_src>
import functools

import jax
import jax.numpy as jnp
import numpy as np
from jax import lax
from jax.experimental import pallas as pl
from jax.experimental.pallas import tpu as pltpu

NUM_ANCHORS_PER_LOC = 2
NUM_INTENTION_CLASSES = 3


def _intention_head_kernel(x_ref, w_ref, b_ref, o_ref, xext_ref, p_ref, *,
                           W, lpad):
    """One batch element.

    x_ref:    (Cin, H*W)        flattened (row-major) input channels
    w_ref:    (Cout, 9*Cin)     conv weight, taps folded into K
    b_ref:    (Cout, 1)         bias (f32)
    o_ref:    (Cout, H*W)       lane-dense output slab
    xext_ref: (Cin, lpad+H*W+W+1) VMEM scratch: zero-extended flat image
    p_ref:    (9*Cin, H*W)      VMEM scratch: im2col slab
    """
    Cin, HW = x_ref.shape

    # Zero-extended flat image: [zeros(lpad) | x | zeros(W+1)].  lpad >= W+1
    # and is a multiple of 128 so the interior store is lane-aligned.
    xext_ref[...] = jnp.zeros_like(xext_ref)
    xext_ref[:, lpad:lpad + HW] = x_ref[...]

    # Column-validity masks for the dx = -1 / +1 taps (hoisted, reused 3x each).
    col = lax.broadcasted_iota(jnp.int32, (Cin, HW), dimension=1) % W
    left_ok = col >= 1           # target column x-1 is in range
    right_ok = col <= W - 2      # target column x+1 is in range
    zero = jnp.zeros((), x_ref.dtype)

    # im2col: tap (ky, kx) of the 3x3 window is a lane shift by (ky-1)*W+(kx-1)
    # of the flat image; row out-of-bounds lands in the zero pads, column
    # out-of-bounds is masked.  Taps stack along the contraction axis.
    for ky in range(3):
        for kx in range(3):
            t = ky * 3 + kx
            s = (ky - 1) * W + (kx - 1)
            slab = xext_ref[:, lpad + s:lpad + s + HW]
            if kx == 0:
                slab = jnp.where(left_ok, slab, zero)
            elif kx == 2:
                slab = jnp.where(right_ok, slab, zero)
            p_ref[t * Cin:(t + 1) * Cin, :] = slab

    # One MXU matmul: (Cout, 9*Cin) @ (9*Cin, H*W) -> (Cout, H*W), f32 acc.
    acc = jnp.dot(w_ref[...], p_ref[...], preferred_element_type=jnp.float32)
    o_ref[...] = (acc + b_ref[...]).astype(o_ref.dtype)


def intention_head_forward(x_nchw, weight, bias,
                           num_anchors=NUM_ANCHORS_PER_LOC,
                           num_classes=NUM_INTENTION_CLASSES,
                           *, compute_dtype=None):
    """Pallas equivalent of IntentionHead.forward.

    x_nchw: (B, Cin, H, W);  weight: (Cout, Cin, 3, 3);  bias: (Cout,)
    returns (B, H, W, num_anchors, num_classes)
    """
    B, Cin, H, W = x_nchw.shape
    Cout = num_anchors * num_classes
    assert weight.shape == (Cout, Cin, 3, 3)
    HW = H * W
    cdt = x_nchw.dtype if compute_dtype is None else compute_dtype

    # Free reshape (contiguous): flatten spatial dims. No transpose, no HBM pad.
    x_flat = x_nchw.reshape(B, Cin, HW).astype(cdt)
    # (Cout, Cin, 3, 3) -> (Cout, 9*Cin) with k = (ky*3+kx)*Cin + ci, matching
    # the row order of the in-kernel im2col slab.
    w2 = jnp.transpose(weight, (0, 2, 3, 1)).reshape(Cout, 9 * Cin).astype(cdt)
    b2 = bias.astype(jnp.float32).reshape(Cout, 1)

    lpad = -(-(W + 1) // 128) * 128        # lane-aligned left pad (>= W+1)
    ext_w = lpad + HW + W + 1

    kernel = functools.partial(_intention_head_kernel, W=W, lpad=lpad)

    out = pl.pallas_call(
        kernel,
        out_shape=jax.ShapeDtypeStruct((B, Cout, HW), x_nchw.dtype),
        grid_spec=pltpu.PrefetchScalarGridSpec(
            num_scalar_prefetch=0,
            grid=(B,),
            in_specs=[
                pl.BlockSpec((pl.Squeezed(), Cin, HW), lambda b: (b, 0, 0)),
                pl.BlockSpec((Cout, 9 * Cin), lambda b: (0, 0)),
                pl.BlockSpec((Cout, 1), lambda b: (0, 0)),
            ],
            out_specs=pl.BlockSpec((pl.Squeezed(), Cout, HW),
                                   lambda b: (b, 0, 0)),
            scratch_shapes=[
                pltpu.VMEM((Cin, ext_w), cdt),       # zero-extended flat image
                pltpu.VMEM((9 * Cin, HW), cdt),      # im2col slab
            ],
        ),
        compiler_params=pltpu.CompilerParams(
            dimension_semantics=("parallel",)),
    )(x_flat, w2, b2)

    # (B, Cout, H*W) -> (B, H, W, A, C)  ==  .view(B, A, C, H, W).permute(0,3,4,1,2)
    out = out.reshape(B, num_anchors, num_classes, H, W)
    return jnp.transpose(out, (0, 3, 4, 1, 2))


def _reference(x_nchw, weight, bias, num_anchors, num_classes):
    out = lax.conv_general_dilated(
        x_nchw, weight, window_strides=(1, 1),
        padding=((1, 1), (1, 1)),
        dimension_numbers=("NCHW", "OIHW", "NCHW"))
    out = out + bias.reshape(1, -1, 1, 1)
    B, _, Hf, Wf = out.shape
    out = out.reshape(B, num_anchors, num_classes, Hf, Wf)
    return jnp.transpose(out, (0, 3, 4, 1, 2))


if __name__ == "__main__":
    B, Cin, H, W = 2, 4, 16, 16
    A, C = NUM_ANCHORS_PER_LOC, NUM_INTENTION_CLASSES
    Cout = A * C

    key = jax.random.PRNGKey(0)
    kx, kw, kb = jax.random.split(key, 3)

    x = jax.random.normal(kx, (B, Cin, H, W), dtype=jnp.float32)
    # Deterministic init mimicking PyTorch Conv2d default (uniform +/- 1/sqrt(fan_in)).
    fan_in = Cin * 3 * 3
    bound = 1.0 / np.sqrt(fan_in)
    weight = jax.random.uniform(kw, (Cout, Cin, 3, 3), jnp.float32,
                                minval=-bound, maxval=bound)
    bias = jax.random.uniform(kb, (Cout,), jnp.float32,
                              minval=-bound, maxval=bound)

    out = intention_head_forward(x, weight, bias, A, C)
    out = jax.block_until_ready(out)
    assert out.shape == (B, H, W, A, C), out.shape

    ref = jax.block_until_ready(_reference(x, weight, bias, A, C))
    np.testing.assert_allclose(np.asarray(out), np.asarray(ref),
                               rtol=1e-3, atol=1e-3)

    print("KERNEL_OK")
</pallas_src>

<mosaic_0001>
module attributes {stable_mosaic.version = 11 : i64} {
  func.func @_intention_head_kernel(%arg0: i32, %arg1: memref<1x4x256xf32, #tpu.memory_space<vmem>>, %arg2: memref<6x36xf32, #tpu.memory_space<vmem>>, %arg3: memref<6x1xf32, #tpu.memory_space<vmem>>, %arg4: memref<1x6x256xf32, #tpu.memory_space<vmem>>, %arg5: memref<4x401xf32, #tpu.memory_space<vmem>>, %arg6: memref<36x256xf32, #tpu.memory_space<vmem>>) attributes {dimension_semantics = [#tpu.dimension_semantics<parallel>], iteration_bounds = array<i64: 2>, scalar_prefetch = 0 : i64, scratch_operands = 2 : i64, tpu.core_type = #tpu.core_type<tc>, window_params = [{transform_indices = @transform_0, window_bounds = array<i64: 1, 4, 256>}, {pipeline_mode = #tpu.pipeline_mode<synchronous>, transform_indices = @transform_1, window_bounds = array<i64: 6, 36>}, {pipeline_mode = #tpu.pipeline_mode<synchronous>, transform_indices = @transform_2, window_bounds = array<i64: 6, 1>}, {transform_indices = @transform_3, window_bounds = array<i64: 1, 6, 256>}]} {
    %cst = arith.constant 0.000000e+00 : f32
    %0 = vector.broadcast %cst : f32 to vector<4x401xf32>
    %c0 = arith.constant 0 : index
    %c0_0 = arith.constant 0 : index
    %1 = vector.load %arg5[%c0, %c0_0] : memref<4x401xf32, #tpu.memory_space<vmem>>, vector<4x401xf32>
    tpu.vector_store %arg5[%c0, %c0_0], %0 {strides = array<i32>} : memref<4x401xf32, #tpu.memory_space<vmem>>, vector<4x401xf32>,
    %c0_1 = arith.constant 0 : index
    %c0_2 = arith.constant 0 : index
    %c0_3 = arith.constant 0 : index
    %2 = vector.load %arg1[%c0_1, %c0_2, %c0_3] : memref<1x4x256xf32, #tpu.memory_space<vmem>>, vector<1x4x256xf32>
    %3 = vector.shape_cast %2 : vector<1x4x256xf32> to vector<4x256xf32>
    %c0_4 = arith.constant 0 : index
    %c128 = arith.constant 128 : index
    %4 = vector.load %arg5[%c0_4, %c128] : memref<4x401xf32, #tpu.memory_space<vmem>>, vector<4x256xf32>
    tpu.vector_store %arg5[%c0_4, %c128], %3 {strides = array<i32>} : memref<4x401xf32, #tpu.memory_space<vmem>>, vector<4x256xf32>,
    %5 = tpu.iota {dimensions = array<i32: 1>} : vector<4x256xi32>
    %c16_i32 = arith.constant 16 : i32
    %c0_i32 = arith.constant 0 : i32
    %6 = arith.cmpi eq, %c16_i32, %c0_i32 : i32
    %c1_i32 = arith.constant 1 : i32
    %7 = arith.select %6, %c1_i32, %c16_i32 : i32
    %8 = vector.broadcast %7 : i32 to vector<4x256xi32>
    %9 = arith.remsi %5, %8 : vector<4x256xi32>
    %c0_i32_5 = arith.constant 0 : i32
    %10 = vector.broadcast %c0_i32_5 : i32 to vector<4x256xi32>
    %11 = arith.cmpi ne, %9, %10 : vector<4x256xi32>
    %c0_i32_6 = arith.constant 0 : i32
    %12 = vector.broadcast %c0_i32_6 : i32 to vector<4x256xi32>
    %13 = arith.cmpi slt, %9, %12 : vector<4x256xi32>
    %c0_i32_7 = arith.constant 0 : i32
    %14 = arith.cmpi slt, %7, %c0_i32_7 : i32
    %15 = vector.broadcast %14 : i1 to vector<4x256xi1>
    %16 = vector.broadcast %15 : vector<4x256xi1> to vector<4x256xi1>
    %17 = arith.xori %13, %16 : vector<4x256xi1>
    %18 = arith.andi %17, %11 : vector<4x256xi1>
    %19 = vector.broadcast %7 : i32 to vector<4x256xi32>
    %20 = arith.addi %9, %19 : vector<4x256xi32>
    %21 = arith.select %18, %20, %9 : vector<4x256xi1>, vector<4x256xi32>
    %c1_i32_8 = arith.constant 1 : i32
    %22 = vector.broadcast %c1_i32_8 : i32 to vector<4x256xi32>
    %23 = arith.cmpi sge, %21, %22 : vector<4x256xi32>
    %c14_i32 = arith.constant 14 : i32
    %24 = vector.broadcast %c14_i32 : i32 to vector<4x256xi32>
    %25 = arith.cmpi sle, %21, %24 : vector<4x256xi32>
    %c0_9 = arith.constant 0 : index
    %c111 = arith.constant 111 : index
    %26 = vector.load %arg5[%c0_9, %c111] : memref<4x401xf32, #tpu.memory_space<vmem>>, vector<4x256xf32>
    %cst_10 = arith.constant 0.000000e+00 : f32
    %27 = vector.broadcast %cst_10 : f32 to vector<4x256xf32>
    %28 = arith.select %23, %26, %27 : vector<4x256xi1>, vector<4x256xf32>
    %c0_11 = arith.constant 0 : index
    %c0_12 = arith.constant 0 : index
    %29 = vector.load %arg6[%c0_11, %c0_12] : memref<36x256xf32, #tpu.memory_space<vmem>>, vector<4x256xf32>
    tpu.vector_store %arg6[%c0_11, %c0_12], %28 {strides = array<i32>} : memref<36x256xf32, #tpu.memory_space<vmem>>, vector<4x256xf32>,
    %c0_13 = arith.constant 0 : index
    %c112 = arith.constant 112 : index
    %30 = vector.load %arg5[%c0_13, %c112] : memref<4x401xf32, #tpu.memory_space<vmem>>, vector<4x256xf32>
    %c4 = arith.constant 4 : index
    %c0_14 = arith.constant 0 : index
    %31 = vector.load %arg6[%c4, %c0_14] : memref<36x256xf32, #tpu.memory_space<vmem>>, vector<4x256xf32>
    tpu.vector_store %arg6[%c4, %c0_14], %30 {strides = array<i32>} : memref<36x256xf32, #tpu.memory_space<vmem>>, vector<4x256xf32>,
    %c0_15 = arith.constant 0 : index
    %c113 = arith.constant 113 : index
    %32 = vector.load %arg5[%c0_15, %c113] : memref<4x401xf32, #tpu.memory_space<vmem>>, vector<4x256xf32>
    %cst_16 = arith.constant 0.000000e+00 : f32
    %33 = vector.broadcast %cst_16 : f32 to vector<4x256xf32>
    %34 = arith.select %25, %32, %33 : vector<4x256xi1>, vector<4x256xf32>
    %c8 = arith.constant 8 : index
    %c0_17 = arith.constant 0 : index
    %35 = vector.load %arg6[%c8, %c0_17] : memref<36x256xf32, #tpu.memory_space<vmem>>, vector<4x256xf32>
    tpu.vector_store %arg6[%c8, %c0_17], %34 {strides = array<i32>} : memref<36x256xf32, #tpu.memory_space<vmem>>, vector<4x256xf32>,
    %c0_18 = arith.constant 0 : index
    %c127 = arith.constant 127 : index
    %36 = vector.load %arg5[%c0_18, %c127] : memref<4x401xf32, #tpu.memory_space<vmem>>, vector<4x256xf32>
    %cst_19 = arith.constant 0.000000e+00 : f32
    %37 = vector.broadcast %cst_19 : f32 to vector<4x256xf32>
    %38 = arith.select %23, %36, %37 : vector<4x256xi1>, vector<4x256xf32>
    %c12 = arith.constant 12 : index
    %c0_20 = arith.constant 0 : index
    %39 = vector.load %arg6[%c12, %c0_20] : memref<36x256xf32, #tpu.memory_space<vmem>>, vector<4x256xf32>
    tpu.vector_store %arg6[%c12, %c0_20], %38 {strides = array<i32>} : memref<36x256xf32, #tpu.memory_space<vmem>>, vector<4x256xf32>,
    %c0_21 = arith.constant 0 : index
    %c128_22 = arith.constant 128 : index
    %40 = vector.load %arg5[%c0_21, %c128_22] : memref<4x401xf32, #tpu.memory_space<vmem>>, vector<4x256xf32>
    %c16 = arith.constant 16 : index
    %c0_23 = arith.constant 0 : index
    %41 = vector.load %arg6[%c16, %c0_23] : memref<36x256xf32, #tpu.memory_space<vmem>>, vector<4x256xf32>
    tpu.vector_store %arg6[%c16, %c0_23], %40 {strides = array<i32>} : memref<36x256xf32, #tpu.memory_space<vmem>>, vector<4x256xf32>,
    %c0_24 = arith.constant 0 : index
    %c129 = arith.constant 129 : index
    %42 = vector.load %arg5[%c0_24, %c129] : memref<4x401xf32, #tpu.memory_space<vmem>>, vector<4x256xf32>
    %cst_25 = arith.constant 0.000000e+00 : f32
    %43 = vector.broadcast %cst_25 : f32 to vector<4x256xf32>
    %44 = arith.select %25, %42, %43 : vector<4x256xi1>, vector<4x256xf32>
    %c20 = arith.constant 20 : index
    %c0_26 = arith.constant 0 : index
    %45 = vector.load %arg6[%c20, %c0_26] : memref<36x256xf32, #tpu.memory_space<vmem>>, vector<4x256xf32>
    tpu.vector_store %arg6[%c20, %c0_26], %44 {strides = array<i32>} : memref<36x256xf32, #tpu.memory_space<vmem>>, vector<4x256xf32>,
    %c0_27 = arith.constant 0 : index
    %c143 = arith.constant 143 : index
    %46 = vector.load %arg5[%c0_27, %c143] : memref<4x401xf32, #tpu.memory_space<vmem>>, vector<4x256xf32>
    %cst_28 = arith.constant 0.000000e+00 : f32
    %47 = vector.broadcast %cst_28 : f32 to vector<4x256xf32>
    %48 = arith.select %23, %46, %47 : vector<4x256xi1>, vector<4x256xf32>
    %c24 = arith.constant 24 : index
    %c0_29 = arith.constant 0 : index
    %49 = vector.load %arg6[%c24, %c0_29] : memref<36x256xf32, #tpu.memory_space<vmem>>, vector<4x256xf32>
    tpu.vector_store %arg6[%c24, %c0_29], %48 {strides = array<i32>} : memref<36x256xf32, #tpu.memory_space<vmem>>, vector<4x256xf32>,
    %c0_30 = arith.constant 0 : index
    %c144 = arith.constant 144 : index
    %50 = vector.load %arg5[%c0_30, %c144] : memref<4x401xf32, #tpu.memory_space<vmem>>, vector<4x256xf32>
    %c28 = arith.constant 28 : index
    %c0_31 = arith.constant 0 : index
    %51 = vector.load %arg6[%c28, %c0_31] : memref<36x256xf32, #tpu.memory_space<vmem>>, vector<4x256xf32>
    tpu.vector_store %arg6[%c28, %c0_31], %50 {strides = array<i32>} : memref<36x256xf32, #tpu.memory_space<vmem>>, vector<4x256xf32>,
    %c0_32 = arith.constant 0 : index
    %c145 = arith.constant 145 : index
    %52 = vector.load %arg5[%c0_32, %c145] : memref<4x401xf32, #tpu.memory_space<vmem>>, vector<4x256xf32>
    %cst_33 = arith.constant 0.000000e+00 : f32
    %53 = vector.broadcast %cst_33 : f32 to vector<4x256xf32>
    %54 = arith.select %25, %52, %53 : vector<4x256xi1>, vector<4x256xf32>
    %c32 = arith.constant 32 : index
    %c0_34 = arith.constant 0 : index
    %55 = vector.load %arg6[%c32, %c0_34] : memref<36x256xf32, #tpu.memory_space<vmem>>, vector<4x256xf32>
    tpu.vector_store %arg6[%c32, %c0_34], %54 {strides = array<i32>} : memref<36x256xf32, #tpu.memory_space<vmem>>, vector<4x256xf32>,
    %c0_35 = arith.constant 0 : index
    %c0_36 = arith.constant 0 : index
    %56 = vector.load %arg2[%c0_35, %c0_36] : memref<6x36xf32, #tpu.memory_space<vmem>>, vector<6x36xf32>
    %c0_37 = arith.constant 0 : index
    %c0_38 = arith.constant 0 : index
    %57 = vector.load %arg6[%c0_37, %c0_38] : memref<36x256xf32, #tpu.memory_space<vmem>>, vector<36x256xf32>
    %cst_39 = arith.constant dense<0.000000e+00> : vector<6x256xf32>
    %58 = tpu.matmul %56, %57, %cst_39 {dimension_numbers = #tpu.dot_dimension_numbers<[1], [0], [0], [1], [0, 0, 1, 1], [], []>} : vector<6x36xf32>, vector<36x256xf32>, vector<6x256xf32> -> vector<6x256xf32>
    %c0_40 = arith.constant 0 : index
    %c0_41 = arith.constant 0 : index
    %59 = vector.load %arg3[%c0_40, %c0_41] : memref<6x1xf32, #tpu.memory_space<vmem>>, vector<6x1xf32>
    %60 = vector.broadcast %59 : vector<6x1xf32> to vector<6x256xf32>
    %61 = arith.addf %58, %60 : vector<6x256xf32>
    %c0_42 = arith.constant 0 : index
    %c0_43 = arith.constant 0 : index
    %c0_44 = arith.constant 0 : index
    %62 = vector.load %arg4[%c0_42, %c0_43, %c0_44] : memref<1x6x256xf32, #tpu.memory_space<vmem>>, vector<1x6x256xf32>
    %63 = vector.shape_cast %62 : vector<1x6x256xf32> to vector<6x256xf32>
    %64 = vector.shape_cast %61 : vector<6x256xf32> to vector<1x6x256xf32>
    tpu.vector_store %arg4[%c0_42, %c0_43, %c0_44], %64 {strides = array<i32>} : memref<1x6x256xf32, #tpu.memory_space<vmem>>, vector<1x6x256xf32>,
    return
  }
  func.func @transform_0(%arg0: i32) -> (i32, i32, i32) {
    %c0_i32 = arith.constant 0 : i32
    %c0_i32_0 = arith.constant 0 : i32
    %c0_i32_1 = arith.constant 0 : i32
    return %arg0, %c0_i32, %c0_i32_0 : i32, i32, i32
  }
  func.func @transform_1(%arg0: i32) -> (i32, i32) {
    %c0_i32 = arith.constant 0 : i32
    %c0_i32_0 = arith.constant 0 : i32
    %c0_i32_1 = arith.constant 0 : i32
    return %c0_i32, %c0_i32_0 : i32, i32
  }
  func.func @transform_2(%arg0: i32) -> (i32, i32) {
    %c0_i32 = arith.constant 0 : i32
    %c0_i32_0 = arith.constant 0 : i32
    %c0_i32_1 = arith.constant 0 : i32
    return %c0_i32, %c0_i32_0 : i32, i32
  }
  func.func @transform_3(%arg0: i32) -> (i32, i32, i32) {
    %c0_i32 = arith.constant 0 : i32
    %c0_i32_0 = arith.constant 0 : i32
    %c0_i32_1 = arith.constant 0 : i32
    return %arg0, %c0_i32, %c0_i32_0 : i32, i32, i32
  }
}

</mosaic_0001>

<llo_original>
// kernel: tpu_custom_call.1
$region0: #{tpu_custom_call.1}
  #allocation0 [shape = 'u32[]', space=smem, size = 0x4, offset = 0x4, fixed_abs, tag = 'smem constant byte address 0x4 - core index']
  #allocation1 [shape = 'u32[72,128]{1,0:T(1,128)}', space=vmem, size = 0x9000, scoped, tag = 'internal scratch']
  #allocation2 [shape = 'f32[4,401]{1,0:T(4,128)}', space=vmem, size = 0x2000, scoped, tag = 'scratch operand']
  #allocation3 [shape = 'f32[36,256]{1,0:T(8,128)}', space=vmem, size = 0xa000, scoped, tag = 'scratch operand']
  %s0 = inlined_call_operand.hbm [shape: f32[2,4,256], index: 0, kind: input, shape index: {}]
  %s1 = inlined_call_operand.vmem [shape: f32[6,36], index: 1, kind: input, shape index: {}]
  %s2 = inlined_call_operand.vmem [shape: f32[6,1], index: 2, kind: input, shape index: {}]
  %s3 = inlined_call_operand.vmem [shape: f32[2,6,256], index: 3, kind: output, shape index: {}]
  %s4 = sld [smem:[#allocation0]]
  $region49: #{tpu_custom_call.1} parent=0
    _
  %s6 = ssub.s32 1, %s4
  %s7 = scalar_select 0, %s6, %s4
  $region1: #{tpu_custom_call.1} parent=0
    #allocation4 [shape = 'u8[8192]{0}', space=vmem, size = 0x2000, scoped, tag = 'input window, operand 0']
    #allocation5 [shape = 's32[2]{0}', space=sflag, size = 0x8, scoped, tag = 'scoped memory for tpu_custom_call.1']
    %8 = vsyncpa [#allocation5], 0
    %s9 = scalar_lea.sflag [#allocation5], 1
    %10 = vsyncpa %s9, 0
    loop: start=0, step=1, limit=4
    $region2: #{tpu_custom_call.1} parent=1 // loop_pre_header
      _
    $region3: #{tpu_custom_call.1} parent=1 // loop_header
      %s12 = sphi 0, %s16
      %p13 = scmp.ge.s32.totalorder %s12, 4
      %s22 = sphi 0, %s24
      %s25 = sphi 0, %s22
      %s26 = sphi 0, %s25
      %s42 = sphi 0, %s26
      %s46 = sphi 0, %s46
      %s48 = sphi 0, %s46
      %s49 = sphi 0, %s48
      %s63 = sphi 0, %s49
      %s67 = sphi 0, %s67
      %s69 = sphi 0, %s67
      %s70 = sphi 0, %s69
      %s84 = sphi 0, %s70
      %s90 = sphi 0, %s92
      %s93 = sphi 0, %s90
      %s94 = sphi 0, %s93
      %s110 = sphi 0, %s94
    $region4: #{tpu_custom_call.1} parent=1 // loop_header_branch
      %15 = sbr.rel (%p13) target = $region8
    $region5: #{tpu_custom_call.1} parent=1 // loop_body
      %s17 = ssub.s32 %s12, 1
      %s18 = ssub.s32 %s12, 2
      %s19 = sadd.s32 %s12, 1
      %s20 = ssub.s32 %s12, %s19
      %p21 = scmp.eq.s32.totalorder %s20, 0
      %s23 = sadd.s32 %s22, 1
      %s24 = scalar_select %p21, %s22, %s23
      %p27 = pneg %p21
      %p28 = scmp.eq.s32.totalorder %s12, 1
      %p29 = por %p27, %p28
      %p30 = scmp.ne.s32.totalorder %s22, %s25
      %p31 = scmp.eq.s32.totalorder %s12, 0
      %p32 = por %p30, %p31
      %p33 = scmp.ne.s32.totalorder %s22, %s25
      %p34 = scmp.eq.s32.totalorder %s17, 1
      %p35 = por %p33, %p34
      %p36 = scmp.ne.s32.totalorder %s25, %s26
      %p37 = scmp.eq.s32.totalorder %s17, 0
      %p38 = por %p36, %p37
      %p39 = scmp.ne.s32.totalorder %s25, %s26
      %p40 = scmp.eq.s32.totalorder %s18, 1
      %p41 = por %p39, %p40
      %p43 = scmp.ne.s32.totalorder %s26, %s42
      %p44 = scmp.eq.s32.totalorder %s18, 0
      %p45 = por %p43, %p44
      %s47 = sadd.s32 %s46, 1
      %p50 = scmp.eq.s32.totalorder %s12, 1
      %p51 = scmp.ne.s32.totalorder %s46, %s48
      %p52 = scmp.eq.s32.totalorder %s12, 0
      %p53 = por %p51, %p52
      %p54 = scmp.ne.s32.totalorder %s46, %s48
      %p55 = scmp.eq.s32.totalorder %s17, 1
      %p56 = por %p54, %p55
      %p57 = scmp.ne.s32.totalorder %s48, %s49
      %p58 = scmp.eq.s32.totalorder %s17, 0
      %p59 = por %p57, %p58
      %p60 = scmp.ne.s32.totalorder %s48, %s49
      %p61 = scmp.eq.s32.totalorder %s18, 1
      %p62 = por %p60, %p61
      %p64 = scmp.ne.s32.totalorder %s49, %s63
      %p65 = scmp.eq.s32.totalorder %s18, 0
      %p66 = por %p64, %p65
      %s68 = sadd.s32 %s67, 1
      %p71 = scmp.eq.s32.totalorder %s12, 1
      %p72 = scmp.ne.s32.totalorder %s67, %s69
      %p73 = scmp.eq.s32.totalorder %s12, 0
      %p74 = por %p72, %p73
      %p75 = scmp.ne.s32.totalorder %s67, %s69
      %p76 = scmp.eq.s32.totalorder %s17, 1
      %p77 = por %p75, %p76
      %p78 = scmp.ne.s32.totalorder %s69, %s70
      %p79 = scmp.eq.s32.totalorder %s17, 0
      %p80 = por %p78, %p79
      %p81 = scmp.ne.s32.totalorder %s69, %s70
      %p82 = scmp.eq.s32.totalorder %s18, 1
      %p83 = por %p81, %p82
      %p85 = scmp.ne.s32.totalorder %s70, %s84
      %p86 = scmp.eq.s32.totalorder %s18, 0
      %p87 = por %p85, %p86
      %s88 = ssub.s32 %s12, %s19
      %p89 = scmp.eq.s32.totalorder %s88, 0
      %s91 = sadd.s32 %s90, 1
      %s92 = scalar_select %p89, %s90, %s91
      %p95 = pneg %p89
      %p96 = scmp.eq.s32.totalorder %s12, 1
      %p97 = por %p95, %p96
      %p98 = scmp.ne.s32.totalorder %s90, %s93
      %p99 = scmp.eq.s32.totalorder %s12, 0
      %p100 = por %p98, %p99
      %p101 = scmp.ne.s32.totalorder %s90, %s93
      %p102 = scmp.eq.s32.totalorder %s17, 1
      %p103 = por %p101, %p102
      %p104 = scmp.ne.s32.totalorder %s93, %s94
      %p105 = scmp.eq.s32.totalorder %s17, 0
      %p106 = por %p104, %p105
      %p107 = scmp.ne.s32.totalorder %s93, %s94
      %p108 = scmp.eq.s32.totalorder %s18, 1
      %p109 = por %p107, %p108
      %p111 = scmp.ne.s32.totalorder %s94, %s110
      %p112 = scmp.eq.s32.totalorder %s18, 0
      %p113 = por %p111, %p112
      %p114 = scmp.le.s32.totalorder 1, %s12
      %p115 = scmp.lt.s32.totalorder %s12, 3
      %p116 = pnand %p114, %p115
      %p117 = pneg %p116
      // Predicated region
      $region9: #{tpu_custom_call.1} parent=5 // pred_check
        _
      $region10: #{tpu_custom_call.1} parent=5 // pred_check_branch
        %119 = sbr.rel (%p116) target = $region12
      $region11: #{tpu_custom_call.1} parent=5 // pred_region
        %s120 = ssub.s32 %s12, 1
        // Predicated region
        $region13: #{tpu_custom_call.1} parent=11 // pred_check
          %p121 = pneg %p59
        $region14: #{tpu_custom_call.1} parent=11 // pred_check_branch
          %123 = sbr.rel (%p121) target = $region16
        $region15: #{tpu_custom_call.1} parent=11 // pred_region
          _
        $region16: #{tpu_custom_call.1} parent=11 // pred_fallthru
          _
        // Predicated region
        $region17: #{tpu_custom_call.1} parent=11 // pred_check
          %p124 = pneg %p80
        $region18: #{tpu_custom_call.1} parent=11 // pred_check_branch
          %126 = sbr.rel (%p124) target = $region20
        $region19: #{tpu_custom_call.1} parent=11 // pred_region
          _
        $region20: #{tpu_custom_call.1} parent=11 // pred_fallthru
          _
      $region12: #{tpu_custom_call.1} parent=5 // pred_fallthru
        _
      %p127 = scmp.lt.s32.totalorder %s12, 2
      // Predicated region
      $region21: #{tpu_custom_call.1} parent=5 // pred_check
        %p128 = pneg %p127
      $region22: #{tpu_custom_call.1} parent=5 // pred_check_branch
        %130 = sbr.rel (%p128) target = $region24
      $region23: #{tpu_custom_call.1} parent=5 // pred_region
        // Predicated region
        $region25: #{tpu_custom_call.1} parent=23 // pred_check
          %p131 = pneg %p32
        $region26: #{tpu_custom_call.1} parent=23 // pred_check_branch
          %133 = sbr.rel (%p131) target = $region28
        $region27: #{tpu_custom_call.1} parent=23 // pred_region
          %s134 = sand.u32 %s22, 1
          %s135 = scalar_lea.sflag [#allocation5], %s134
          %s136 = sand.u32 %s22, 1
          %s137 = smul.addr %s136, 8
          %s138 = scalar_lea.vmem [#allocation4], %s137
          %140 = vsyncadd %s135, 0
          %s141 = smul.addr %s12, 2
          %s142 = smul.addr %s141, 4
          %s143 = scalar_lea.hbm %s0, %s142
          %s145 = sshll.u32 %s143, 4
          %s146 = int_to_ptr.hbm [resolvable:$true] %s145
          %s147 = sshll.u32 %s138, 4
          %s148 = int_to_ptr.vmem [resolvable:$true] %s147
          %150 = dma.hbm_to_vmem [thread:$0]  %s146, 128, %s148, %s135
        $region28: #{tpu_custom_call.1} parent=23 // pred_fallthru
          _
      $region24: #{tpu_custom_call.1} parent=5 // pred_fallthru
        _
      %p151 = scmp.le.s32.totalorder 1, %s12
      %p152 = scmp.lt.s32.totalorder %s12, 3
      %p153 = pnand %p151, %p152
      %p154 = pneg %p153
      // Predicated region
      $region29: #{tpu_custom_call.1} parent=5 // pred_check
        _
      $region30: #{tpu_custom_call.1} parent=5 // pred_check_branch
        %156 = sbr.rel (%p153) target = $region32
      $region31: #{tpu_custom_call.1} parent=5 // pred_region
        %s157 = ssub.s32 %s12, 1
        %s158 = sand.u32 %s25, 1
        %s159 = scalar_lea.sflag [#allocation5], %s158
        %s160 = sand.u32 %s25, 1
        %s161 = smul.addr %s160, 8
        %s162 = scalar_lea.vmem [#allocation4], %s161
        // Predicated region
        $region33: #{tpu_custom_call.1} parent=31 // pred_check
          %p163 = pneg %p38
        $region34: #{tpu_custom_call.1} parent=31 // pred_check_branch
          %165 = sbr.rel (%p163) target = $region36
        $region35: #{tpu_custom_call.1} parent=31 // pred_region
          %167 = dma.done %s159, 128
        $region36: #{tpu_custom_call.1} parent=31 // pred_fallthru
          _
        %s168 = sand.u32 %s25, 1
        %s169 = scalar_lea.sflag [#allocation5], %s168
        %s170 = sand.u32 %s25, 1
        %s171 = smul.addr %s170, 8
        %s172 = scalar_lea.vmem [#allocation4], %s171
        %p173 = pneg %p38
        %p174 = pneg %p35
        %p175 = pneg %p59
        %p176 = pneg %p56
        %p177 = pneg %p80
        %p178 = pneg %p77
        %p179 = pneg %p106
        %p180 = pneg %p103
        %p181 = scmp.lt.s32.totalorder %s17, 1
        %s182 = scalar_select %p181, %s17, 1
        %s183 = smul.addr %s182, 2
        %s184 = smul.addr %s183, 8
        %s185 = scalar_lea.vmem %s3, %s184
        %p186 = scmp.lt.s32.totalorder %s17, 1
        %s187 = scalar_select %p186, %s17, 1
        %s188 = smul.addr %s187, 2
        %s189 = smul.addr %s188, 8
        %s190 = scalar_lea.vmem %s3, %s189
        %191 = vst [vmem:[#allocation2] sm:$0xff] 0.0
        %vm192 = vcmask 1043456
        %vm193 = vcmask 138244
        %vm194 = vmor %vm193, %vm192
        %195 = vst.msk [vmem:[#allocation2 + $0x8] sm:$0xff] %vm194, 0.0
        %v196 = vld [vmem:[%s162] sm:$0xff]
        %197 = vst [vmem:[#allocation2 + $0x4] sm:$0xff] %v196
        %v198 = vlaneseq
        %v199 = vand.u32 %v198, 127
        %v200 = vadd.s32 %v199, 128
        %vm201 = vcmp.lt.s32.totalorder %v199, 0
        %v202 = vsub.s32 0, %v199
        %v203 = vsel %vm201, %v202, %v199
        %v204 = vshrl.u32 %v203, 4
        %v205 = vand.u32 %v203, 15
        %v206 = vsub.s32 0, %v205
        %v207 = vsel %vm201, %v206, %v205
        %vm208 = vcmp.lt.s32.totalorder %v200, 0
        %v209 = vsub.s32 0, %v200
        %v210 = vsel %vm208, %v209, %v200
        %v211 = vshrl.u32 %v210, 4
        %v212 = vand.u32 %v210, 15
        %v213 = vsub.s32 0, %v212
        %v214 = vsel %vm208, %v213, %v212
        %vm215 = vcmp.ne.s32.totalorder %v207, 0
        %vm216 = vcmp.ne.s32.totalorder %v214, 0
        %vm217 = vcmp.lt.s32.totalorder %v207, 0
        %vm218 = vcmp.lt.s32.totalorder %v214, 0
        %vm219 = vmand %vm217, %vm215
        %vm220 = vmand %vm218, %vm216
        %v221 = vadd.s32 %v207, 16
        %v222 = vadd.s32 %v214, 16
        %v223 = vsel %vm219, %v221, %v207
        %v224 = vsel %vm220, %v222, %v214
        %vm225 = vcmp.ge.s32.totalorder %v223, 1
        %vm226 = vcmp.ge.s32.totalorder %v224, 1
        %vm227 = vcmp.le.s32.totalorder %v223, 14
        %vm228 = vcmp.le.s32.totalorder %v224, 14
        %v229 = vld [vmem:[#allocation2] sm:$0xff]
        %v230 = vld [vmem:[#allocation2 + $0x8] sm:$0xf]
        %233 = vst [vmem:[#allocation1] ss:$2 sm:$0xff] %v229
        %s234 = scalar_lea.vmem [#allocation1], 16
        %235 = vst [vmem:[%s234] ss:$2 sm:$0xff] %v230
        %v236 = vld.sshfl [vmem:[#allocation1] sm:$0xff pattern:$0x75316420]
        %v237 = vld.sshfl [vmem:[#allocation1 + $0x8] sm:$0xff pattern:$0x75316420]
        %v238 = vld.sshfl [vmem:[#allocation1 + $0x10] sm:$0xff pattern:$0x75316420]
        %239 = vrot.lane.b32.xlu0 %v236, 17
        %v240 = vpop.permute.xlu0 %239
        %241 = vrot.lane.b32.xlu0 %v237, 17
        %v242 = vpop.permute.xlu0 %241
        %243 = vrot.lane.b32.xlu0 %v238, 17
        %v244 = vpop.permute.xlu0 %243
        %vm245 = vcmask 138240
        %v246 = vsel %vm245, %v240, %v242
        %v247 = vsel %vm245, %v242, %v244
        %v250 = vsel %vm225, %v246, 0.0
        %v251 = vsel %vm226, %v247, 0.0
        %252 = vst [vmem:[#allocation3] sm:$0xf] %v250
        %253 = vst [vmem:[#allocation3 + $0x8] sm:$0xf] %v251
        %v254 = vld [vmem:[#allocation2] sm:$0xff]
        %v255 = vld [vmem:[#allocation2 + $0x8] sm:$0xf]
        %s258 = scalar_lea.vmem [#allocation1], 1
        %259 = vst [vmem:[%s258] ss:$2 sm:$0xff] %v254
        %s260 = scalar_lea.vmem [#allocation1], 17
        %261 = vst [vmem:[%s260] ss:$2 sm:$0xff] %v255
        %v262 = vld.sshfl [vmem:[#allocation1] sm:$0xff pattern:$0x75316420]
        %v263 = vld.sshfl [vmem:[#allocation1 + $0x8] sm:$0xff pattern:$0x75316420]
        %v264 = vld.sshfl [vmem:[#allocation1 + $0x10] sm:$0xff pattern:$0x75316420]
        %265 = vrot.lane.b32.xlu0 %v262, 16
        %v266 = vpop.permute.xlu0 %265
        %267 = vrot.lane.b32.xlu0 %v263, 16
        %v268 = vpop.permute.xlu0 %267
        %269 = vrot.lane.b32.xlu0 %v264, 16
        %v270 = vpop.permute.xlu0 %269
        %vm271 = vcmask 130048
        %v272 = vsel %vm271, %v266, %v268
        %v273 = vsel %vm271, %v268, %v270
        %276 = vst [vmem:[#allocation3] sm:$0xf0] %v272
        %277 = vst [vmem:[#allocation3 + $0x8] sm:$0xf0] %v273
        %v278 = vld [vmem:[#allocation2] sm:$0xff]
        %v279 = vld [vmem:[#allocation2 + $0x8] sm:$0xf]
        %282 = vst [vmem:[#allocation1] ss:$2 sm:$0xff] %v278
        %s283 = scalar_lea.vmem [#allocation1], 16
        %284 = vst [vmem:[%s283] ss:$2 sm:$0xff] %v279
        %v285 = vld.sshfl [vmem:[#allocation1] sm:$0xff pattern:$0x75316420]
        %v286 = vld.sshfl [vmem:[#allocation1 + $0x8] sm:$0xff pattern:$0x75316420]
        %v287 = vld.sshfl [vmem:[#allocation1 + $0x10] sm:$0xff pattern:$0x75316420]
        %288 = vrot.lane.b32.xlu0 %v285, 15
        %v289 = vpop.permute.xlu0 %288
        %290 = vrot.lane.b32.xlu0 %v286, 15
        %v291 = vpop.permute.xlu0 %290
        %292 = vrot.lane.b32.xlu0 %v287, 15
        %v293 = vpop.permute.xlu0 %292
        %vm294 = vcmask 121856
        %v295 = vsel %vm294, %v289, %v291
        %v296 = vsel %vm294, %v291, %v293
        %v299 = vsel %vm227, %v295, 0.0
        %v300 = vsel %vm228, %v296, 0.0
        %301 = vst [vmem:[#allocation3 + $0x10] sm:$0xf] %v299
        %302 = vst [vmem:[#allocation3 + $0x18] sm:$0xf] %v300
        %v303 = vld [vmem:[#allocation2] sm:$0xff]
        %v304 = vld [vmem:[#allocation2 + $0x8] sm:$0xf]
        %307 = vst [vmem:[#allocation1] ss:$2 sm:$0xff] %v303
        %s308 = scalar_lea.vmem [#allocation1], 16
        %309 = vst [vmem:[%s308] ss:$2 sm:$0xff] %v304
        %v310 = vld.sshfl [vmem:[#allocation1] sm:$0xff pattern:$0x75316420]
        %v311 = vld.sshfl [vmem:[#allocation1 + $0x8] sm:$0xff pattern:$0x75316420]
        %v312 = vld.sshfl [vmem:[#allocation1 + $0x10] sm:$0xff pattern:$0x75316420]
        %313 = vrot.lane.b32.xlu0 %v310, 1
        %v314 = vpop.permute.xlu0 %313
        %315 = vrot.lane.b32.xlu0 %v311, 1
        %v316 = vpop.permute.xlu0 %315
        %317 = vrot.lane.b32.xlu0 %v312, 1
        %v318 = vpop.permute.xlu0 %317
        %vm319 = vcmask 7168
        %v320 = vsel %vm319, %v314, %v316
        %v321 = vsel %vm319, %v316, %v318
        %v324 = vsel %vm225, %v320, 0.0
        %v325 = vsel %vm226, %v321, 0.0
        %v328 = vrot.slane %v324, 4
        %v329 = vrot.slane %v325, 4
        %332 = vst [vmem:[#allocation3 + $0x10] sm:$0xf0] %v328
        %333 = vst [vmem:[#allocation3 + $0x18] sm:$0xf0] %v329
        %v334 = vld [vmem:[#allocation2 + $0x4] sm:$0xff]
        %336 = vst [vmem:[#allocation1] ss:$2 sm:$0xff] %v334
        %v337 = vld.sshfl [vmem:[#allocation1] sm:$0xff pattern:$0x75316420]
        %v338 = vld.sshfl [vmem:[#allocation1 + $0x8] sm:$0xff pattern:$0x75316420]
        %341 = vst [vmem:[#allocation3 + $0x20] sm:$0xf] %v337
        %342 = vst [vmem:[#allocation3 + $0x28] sm:$0xf] %v338
        %v343 = vld [vmem:[#allocation2 + $0x4] sm:$0xff]
        %v344 = vld [vmem:[#allocation2 + $0xc] sm:$0xf]
        %347 = vst [vmem:[#allocation1] ss:$2 sm:$0xff] %v343
        %s348 = scalar_lea.vmem [#allocation1], 16
        %349 = vst [vmem:[%s348] ss:$2 sm:$0xff] %v344
        %v350 = vld.sshfl [vmem:[#allocation1] sm:$0xff pattern:$0x75316420]
        %v351 = vld.sshfl [vmem:[#allocation1 + $0x8] sm:$0xff pattern:$0x75316420]
        %v352 = vld.sshfl [vmem:[#allocation1 + $0x10] sm:$0xff pattern:$0x75316420]
        %353 = vrot.lane.b32.xlu0 %v350, 127
        %v354 = vpop.permute.xlu0 %353
        %355 = vrot.lane.b32.xlu0 %v351, 127
        %v356 = vpop.permute.xlu0 %355
        %357 = vrot.lane.b32.xlu0 %v352, 127
        %v358 = vpop.permute.xlu0 %357
        %vm359 = vcmask 1039360
        %v360 = vsel %vm359, %v354, %v356
        %v361 = vsel %vm359, %v356, %v358
        %v364 = vsel %vm227, %v360, 0.0
        %v365 = vsel %vm228, %v361, 0.0
        %v368 = vrot.slane %v364, 4
        %v369 = vrot.slane %v365, 4
        %372 = vst [vmem:[#allocation3 + $0x20] sm:$0xf0] %v368
        %373 = vst [vmem:[#allocation3 + $0x28] sm:$0xf0] %v369
        %v374 = vld [vmem:[#allocation2 + $0x4] sm:$0xff]
        %v375 = vld [vmem:[#allocation2 + $0xc] sm:$0xf]
        %378 = vst [vmem:[#allocation1] ss:$2 sm:$0xff] %v374
        %s379 = scalar_lea.vmem [#allocation1], 16
        %380 = vst [vmem:[%s379] ss:$2 sm:$0xff] %v375
        %v381 = vld.sshfl [vmem:[#allocation1] sm:$0xff pattern:$0x75316420]
        %v382 = vld.sshfl [vmem:[#allocation1 + $0x8] sm:$0xff pattern:$0x75316420]
        %v383 = vld.sshfl [vmem:[#allocation1 + $0x10] sm:$0xff pattern:$0x75316420]
        %384 = vrot.lane.b32.xlu0 %v381, 113
        %v385 = vpop.permute.xlu0 %384
        %386 = vrot.lane.b32.xlu0 %v382, 113
        %v387 = vpop.permute.xlu0 %386
        %388 = vrot.lane.b32.xlu0 %v383, 113
        %v389 = vpop.permute.xlu0 %388
        %vm390 = vcmask 924672
        %v391 = vsel %vm390, %v385, %v387
        %v392 = vsel %vm390, %v387, %v389
        %v395 = vsel %vm225, %v391, 0.0
        %v396 = vsel %vm226, %v392, 0.0
        %397 = vst [vmem:[#allocation3 + $0x30] sm:$0xf] %v395
        %398 = vst [vmem:[#allocation3 + $0x38] sm:$0xf] %v396
        %v399 = vld [vmem:[#allocation2 + $0x4] sm:$0xff]
        %v400 = vld [vmem:[#allocation2 + $0xc] sm:$0xf]
        %s403 = scalar_lea.vmem [#allocation1], 1
        %404 = vst [vmem:[%s403] ss:$2 sm:$0xff] %v399
        %s405 = scalar_lea.vmem [#allocation1], 17
        %406 = vst [vmem:[%s405] ss:$2 sm:$0xff] %v400
        %v407 = vld.sshfl [vmem:[#allocation1] sm:$0xff pattern:$0x75316420]
        %v408 = vld.sshfl [vmem:[#allocation1 + $0x8] sm:$0xff pattern:$0x75316420]
        %v409 = vld.sshfl [vmem:[#allocation1 + $0x10] sm:$0xff pattern:$0x75316420]
        %410 = vrot.lane.b32.xlu0 %v407, 112
        %v411 = vpop.permute.xlu0 %410
        %412 = vrot.lane.b32.xlu0 %v408, 112
        %v413 = vpop.permute.xlu0 %412
        %414 = vrot.lane.b32.xlu0 %v409, 112
        %v415 = vpop.permute.xlu0 %414
        %vm416 = vcmask 916480
        %v417 = vsel %vm416, %v411, %v413
        %v418 = vsel %vm416, %v413, %v415
        %421 = vst [vmem:[#allocation3 + $0x30] sm:$0xf0] %v417
        %422 = vst [vmem:[#allocation3 + $0x38] sm:$0xf0] %v418
        %v423 = vld [vmem:[#allocation2 + $0x4] sm:$0xff]
        %v424 = vld [vmem:[#allocation2 + $0xc] sm:$0xf]
        %427 = vst [vmem:[#allocation1] ss:$2 sm:$0xff] %v423
        %s428 = scalar_lea.vmem [#allocation1], 16
        %429 = vst [vmem:[%s428] ss:$2 sm:$0xff] %v424
        %v430 = vld.sshfl [vmem:[#allocation1] sm:$0xff pattern:$0x75316420]
        %v431 = vld.sshfl [vmem:[#allocation1 + $0x8] sm:$0xff pattern:$0x75316420]
        %v432 = vld.sshfl [vmem:[#allocation1 + $0x10] sm:$0xff pattern:$0x75316420]
        %433 = vrot.lane.b32.xlu0 %v430, 111
        %v434 = vpop.permute.xlu0 %433
        %435 = vrot.lane.b32.xlu0 %v431, 111
        %v436 = vpop.permute.xlu0 %435
        %437 = vrot.lane.b32.xlu0 %v432, 111
        %v438 = vpop.permute.xlu0 %437
        %vm439 = vcmask 908288
        %v440 = vsel %vm439, %v434, %v436
        %v441 = vsel %vm439, %v436, %v438
        %v444 = vsel %vm227, %v440, 0.0
        %v445 = vsel %vm228, %v441, 0.0
        %446 = vst [vmem:[#allocation3 + $0x40] sm:$0xf] %v444
        %447 = vst [vmem:[#allocation3 + $0x48] sm:$0xf] %v445
        %v448 = vld [vmem:[%s1] sm:$0x3f]
        %v449 = vld [vmem:[#allocation3] sm:$0xff]
        %v450 = vld [vmem:[#allocation3 + $0x8] sm:$0xff]
        %v451 = vld [vmem:[#allocation3 + $0x10] sm:$0xff]
        %v452 = vld [vmem:[#allocation3 + $0x18] sm:$0xff]
        %v453 = vld [vmem:[#allocation3 + $0x20] sm:$0xff]
        %v454 = vld [vmem:[#allocation3 + $0x28] sm:$0xff]
        %v455 = vld [vmem:[#allocation3 + $0x30] sm:$0xff]
        %v456 = vld [vmem:[#allocation3 + $0x38] sm:$0xff]
        %v457 = vld [vmem:[#allocation3 + $0x40] sm:$0xf]
        %v458 = vld [vmem:[#allocation3 + $0x48] sm:$0xf]
        %v459 = vld [vmem:[%s2] sm:$0x3f]
        %461 = vset.pattern.permute.xlu0 0
        %462 = vperm.xlu0 %461, %v459
        %v463 = vpop.permute.xlu0 %462
        %vm465 = vcmask 293888
        %v467 = vsel %vm465, %v448, 0
        %v470 = vsel %vm192, %v457, 0
        %v473 = vsel %vm192, %v458, 0
        %475 = vmatpush.msra.mxu0 0.0
        %476 = vmatpush.msra.mxu0 0.0
        %477 = vmatpush.msra.mxu0 0.0
        %478 = vmatpush.msra.mxu0 0.0
        %479 = vmatpush.msra.mxu0 0.0
        %480 = vmatpush.msra.mxu0 0.0
        %481 = vmatpush.msra.mxu0 0.0
        %482 = vmatpush.msra.mxu0 0.0
        %483 = vmatpush.msra.mxu0 0.0
        %484 = vmatpush.msra.mxu0 0.0
        %485 = vmatpush.msra.mxu0 0.0
        %486 = vmatpush.msra.mxu0 %v470
        %487 = vmatpush.msra.mxu0 %v455
        %488 = vmatpush.msra.mxu0 %v453
        %489 = vmatpush.msra.mxu0 %v451
        %490 = vmatpush.msra.mxu0 %v449
        %491 = vmatmul.f32.gmra.mxu0 %v467
        %v492 = vpop.f32.mrf.mxu0
        %v493 = vadd.f32 %v463, %v492
        %494 = vdwg.mxu0
        %495 = vmatpush.msra.mxu0 0.0
        %496 = vmatpush.msra.mxu0 0.0
        %497 = vmatpush.msra.mxu0 0.0
        %498 = vmatpush.msra.mxu0 0.0
        %499 = vmatpush.msra.mxu0 0.0
        %500 = vmatpush.msra.mxu0 0.0
        %501 = vmatpush.msra.mxu0 0.0
        %502 = vmatpush.msra.mxu0 0.0
        %503 = vmatpush.msra.mxu0 0.0
        %504 = vmatpush.msra.mxu0 0.0
        %505 = vmatpush.msra.mxu0 0.0
        %506 = vmatpush.msra.mxu0 %v473
        %507 = vmatpush.msra.mxu0 %v456
        %508 = vmatpush.msra.mxu0 %v454
        %509 = vmatpush.msra.mxu0 %v452
        %510 = vmatpush.msra.mxu0 %v450
        %511 = vmatmul.f32.gmra.mxu0 %v467
        %v512 = vpop.f32.mrf.mxu0
        %v513 = vadd.f32 %v463, %v512
        %514 = vdwg.mxu0
        %515 = vst [vmem:[%s190] sm:$0x3f] %v493
        %516 = vst [vmem:[%s190 + $0x8] sm:$0x3f] %v513
        %p517 = scmp.lt.s32.totalorder %s17, 1
        %s518 = scalar_select %p517, %s17, 1
        %s519 = smul.addr %s518, 2
        %s520 = smul.addr %s519, 8
        %s521 = scalar_lea.vmem %s3, %s520
        // Predicated region
        $region37: #{tpu_custom_call.1} parent=31 // pred_check
          %p522 = pneg %p103
        $region38: #{tpu_custom_call.1} parent=31 // pred_check_branch
          %524 = sbr.rel (%p522) target = $region40
        $region39: #{tpu_custom_call.1} parent=31 // pred_region
          _
        $region40: #{tpu_custom_call.1} parent=31 // pred_fallthru
          _
      $region32: #{tpu_custom_call.1} parent=5 // pred_fallthru
        _
      %p525 = scmp.le.s32.totalorder 2, %s12
      // Predicated region
      $region41: #{tpu_custom_call.1} parent=5 // pred_check
        %p526 = pneg %p525
      $region42: #{tpu_custom_call.1} parent=5 // pred_check_branch
        %528 = sbr.rel (%p526) target = $region44
      $region43: #{tpu_custom_call.1} parent=5 // pred_region
        %s529 = ssub.s32 %s12, 2
        // Predicated region
        $region45: #{tpu_custom_call.1} parent=43 // pred_check
          %p530 = pneg %p109
        $region46: #{tpu_custom_call.1} parent=43 // pred_check_branch
          %532 = sbr.rel (%p530) target = $region48
        $region47: #{tpu_custom_call.1} parent=43 // pred_region
          %p533 = scmp.lt.s32.totalorder %s18, 1
          %s534 = scalar_select %p533, %s18, 1
          %s535 = smul.addr %s534, 2
          %s536 = smul.addr %s535, 8
          %s537 = scalar_lea.vmem %s3, %s536
        $region48: #{tpu_custom_call.1} parent=43 // pred_fallthru
          _
      $region44: #{tpu_custom_call.1} parent=5 // pred_fallthru
        _
    $region6: #{tpu_custom_call.1} parent=1 // loop_footer
      %s16 = sadd.s32 1, %s12
    $region7: #{tpu_custom_call.1} parent=1 // loop_footer_branch
      %11 = sbr.rel target = $region3
    $region8: #{tpu_custom_call.1} parent=1 // loop_exit
      _
    %538 = vsyncpa [#allocation5], 1
    %s539 = scalar_lea.sflag [#allocation5], 1
    %540 = vsyncpa %s539, 1

</llo_original>
